<compile_context>
chip_gen: v6e
topology: v6e:2x2x1
jax: 0.10.0
libtpu: 0.0.40
codegen_flags: <defaults>
</compile_context>

<pallas_src>
import functools
import math

import jax
import jax.numpy as jnp
from jax import lax
from jax.experimental import pallas as pl
from jax.experimental.pallas import tpu as pltpu

LANE = 128
MAX_TILE_ROWS = 4096                    # 4096 x 128 f32 = 2 MiB / input / buffer
VMEM_LIMIT = 48 * 1024 * 1024           # scoped VMEM budget (under v7x 64 MiB physical)
FUSE_MASK_MAX_BYTES = 2 * 1024 * 1024   # fuse BCE if each mask input <= 2 MiB


def _cdiv(a, b):
    return -(-a // b)


def _round_up(x, m):
    return _cdiv(x, m) * m


def _sublane_align(dtype):
    # dtype-aware sublane alignment: 8 for 4-byte, 16 for 2-byte, 32 for 1-byte.
    return {4: 8, 2: 16, 1: 32}.get(jnp.dtype(dtype).itemsize, 8)


# ----------------------------------------------------------------------------
# Kernels
# ----------------------------------------------------------------------------
def _accum_tile(x_ref, t_ref, out_ref, *, k, b, use_mweight, use_reg, p,
                rows_total, tile_s, tiles_per_chunk, exact_cover):
    """Grid = (batch, chunk, row_tile).  Accumulates into the resident output
    block: rows 0:8 = smooth-L1 partial sums, rows 8:16 = sum |x|^p partials.
    Sublane collapse is deferred to the JAX glue (no per-step XLU / vst.msk)."""
    c = pl.program_id(1)
    j = pl.program_id(2)

    @pl.when(j == 0)
    def _init():
        out_ref[...] = jnp.zeros_like(out_ref)

    def body(valid_rows):
        # Cast AFTER the VMEM load: HBM traffic stays in the native input dtype.
        x = x_ref[...].astype(jnp.float32)
        t = t_ref[...].astype(jnp.float32)
        if valid_rows is not None:
            rid = lax.broadcasted_iota(jnp.int32, (tile_s, 1), 0)
            keep = rid < valid_rows
            # zeros contribute 0 to both the smooth-L1 sum and sum |x|^p
            x = jnp.where(keep, x, 0.0)
            t = jnp.where(keep, t, 0.0)

        # branchless smooth-L1 (beta = 1): c = min(|d|,1); c*(|d| - 0.5c)
        d = x - t
        ad = jnp.abs(d)
        cl = jnp.minimum(ad, 1.0)
        sl1 = cl * (ad - 0.5 * cl)
        if use_mweight:
            # jhmsII = 1 where target >= 0.5 else 0 ; mWeight = k*target + b*II
            ii = jnp.where(t >= 0.5, 1.0, 0.0)
            sl1 = (k * t + b * ii) * sl1
        # reduce (tile_s,128) -> (8,128): pure VALU adds, aligned full-vreg RMW
        out_ref[0:8, :] += sl1.reshape(tile_s // 8, 8, LANE).sum(axis=0)

        if use_reg:
            if p == 2:
                pp = x * x
            elif p == 1:
                pp = jnp.abs(x)
            elif isinstance(p, int) and p > 2:
                ax = jnp.abs(x)
                pp = ax
                for _ in range(p - 1):      # VALU multiplies; keep the EUP free
                    pp = pp * ax
            else:
                # TODO(synk): non-integer p falls back to transcendental pow.
                pp = jnp.abs(x) ** p
            out_ref[8:16, :] += pp.reshape(tile_s // 8, 8, LANE).sum(axis=0)

    if exact_cover:
        # statically known: every tile is full -> no masking code emitted at all
        body(None)
    else:
        row_start = (c * tiles_per_chunk + j) * tile_s
        is_full = row_start + tile_s <= rows_total

        @pl.when(is_full)
        def _full():
            body(None)

        @pl.when(jnp.logical_not(is_full))
        def _partial():
            body(rows_total - row_start)


def _jhms_kernel(x_ref, t_ref, out_ref, **kw):
    _accum_tile(x_ref, t_ref, out_ref, **kw)


def _jhms_bce_kernel(x_ref, t_ref, m_ref, mt_ref, out_ref, **kw):
    """Fused variant: the (small) mask blocks are resident (constant index map);
    the BCE sum is computed once, on the first grid point, into rows 16:24."""
    _accum_tile(x_ref, t_ref, out_ref, **kw)
    i = pl.program_id(0)
    c = pl.program_id(1)
    j = pl.program_id(2)

    @pl.when(jnp.logical_and(j == 0, jnp.logical_and(i == 0, c == 0)))
    def _bce():
        m = m_ref[...].astype(jnp.float32)
        mt = mt_ref[...].astype(jnp.float32)
        # F.binary_cross_entropy elementwise (torch clamps log at -100);
        # rewritten as -(log1m + t*(logm - log1m)) to save a VALU mul.
        log_m = jnp.maximum(jnp.log(m), -100.0)
        log_1m = jnp.maximum(jnp.log(1.0 - m), -100.0)
        bce = -(log_1m + mt * (log_m - log_1m))
        out_ref[16:24, :] = jnp.full((8, LANE), jnp.sum(bce), jnp.float32)


def _bce_stream_kernel(m_ref, mt_ref, out_ref, *, rows_total, tile_s):
    """Fallback streaming BCE for large masks. Grid = (row_tiles,)."""
    j = pl.program_id(0)

    @pl.when(j == 0)
    def _():
        out_ref[...] = jnp.zeros_like(out_ref)

    m = m_ref[...].astype(jnp.float32)
    mt = mt_ref[...].astype(jnp.float32)
    if rows_total % tile_s != 0:
        rid = lax.broadcasted_iota(jnp.int32, (tile_s, 1), 0)
        keep = rid < (rows_total - j * tile_s)
        # (m=1, t=1) gives exactly 0 BCE for masked rows
        m = jnp.where(keep, m, 1.0)
        mt = jnp.where(keep, mt, 1.0)
    log_m = jnp.maximum(jnp.log(m), -100.0)
    log_1m = jnp.maximum(jnp.log(1.0 - m), -100.0)
    bce = -(log_1m + mt * (log_m - log_1m))
    out_ref[...] += bce.reshape(tile_s // 8, 8, LANE).sum(axis=0)


# ----------------------------------------------------------------------------
# Wrappers
# ----------------------------------------------------------------------------
def _bce_stream(mask, mask_target):
    n_mask = math.prod(mask.shape)
    m = mask.reshape(-1)
    mt = mask_target.reshape(-1)
    rem = n_mask % LANE
    if rem:
        # TODO(synk): <=127-element pad for a non-128-multiple mask; (1,1)
        # padding contributes exactly 0 to the BCE sum.
        pad = LANE - rem
        m = jnp.concatenate([m, jnp.ones((pad,), m.dtype)])
        mt = jnp.concatenate([mt, jnp.ones((pad,), mt.dtype)])
    rows = _cdiv(n_mask, LANE)
    m = m.reshape(rows, LANE)
    mt = mt.reshape(rows, LANE)

    align = _sublane_align(mask.dtype)
    tile_m = min(_round_up(rows, align), _round_up(MAX_TILE_ROWS, align))
    n_tiles = _cdiv(rows, tile_m)
    part = pl.pallas_call(
        functools.partial(_bce_stream_kernel, rows_total=rows, tile_s=tile_m),
        out_shape=jax.ShapeDtypeStruct((8, LANE), jnp.float32),
        grid=(n_tiles,),
        in_specs=[pl.BlockSpec((tile_m, LANE), lambda j: (j, 0)),
                  pl.BlockSpec((tile_m, LANE), lambda j: (j, 0))],
        out_specs=pl.BlockSpec((8, LANE), lambda j: (0, 0)),
        compiler_params=pltpu.CompilerParams(
            dimension_semantics=("arbitrary",),
            vmem_limit_bytes=VMEM_LIMIT),
        cost_estimate=pl.CostEstimate(
            flops=6 * n_mask, transcendentals=2 * n_mask,
            bytes_accessed=2 * n_mask * jnp.dtype(mask.dtype).itemsize),
    )(m, mt)
    return jnp.sum(part)


def my_loss(jhms, jhms_target, mask, mask_target, *,
            m_weight_jhms_param=(2.0, 1.0), mask_weight=0.5,
            jhms_regular_norm=2, jhms_regular_weight=0.01,
            max_tile_rows=MAX_TILE_ROWS, fuse_mask_max_bytes=FUSE_MASK_MAX_BYTES):
    """JAX/Pallas equivalent of MyLoss.forward. Returns (totalLoss, lossVal)."""
    k, b = float(m_weight_jhms_param[0]), float(m_weight_jhms_param[1])
    use_mweight = bool(k) and bool(b)        # intentionally mirrors `if k and b:`
    use_reg = bool(jhms_regular_weight)
    use_mask = bool(mask_weight)
    p = jhms_regular_norm

    B = jhms.shape[0]
    feat = math.prod(jhms.shape[1:])
    n_jhms = B * feat
    n_mask = math.prod(mask.shape)
    in_bytes = jnp.dtype(jhms.dtype).itemsize

    # ----- lane-dense (B, rows, 128) view of the jhms stream (copy-free) -----
    jh = jhms.reshape(B, feat)               # native dtype, no astype in wrapper
    jt = jhms_target.reshape(B, feat)
    rem = feat % LANE
    if rem:
        # TODO(synk): feat % 128 != 0 needs a <=127-element zero pad per batch
        # (zeros contribute 0 to both sums); a fully copy-free path would need
        # element-level lane masking inside the kernel.
        jh = jnp.pad(jh, ((0, 0), (0, LANE - rem)))
        jt = jnp.pad(jt, ((0, 0), (0, LANE - rem)))
    rows = _cdiv(feat, LANE)
    jh = jh.reshape(B, rows, LANE)
    jt = jt.reshape(B, rows, LANE)

    align = _sublane_align(jhms.dtype)
    tile_cap = _round_up(max_tile_rows, align)
    tile_s = min(_round_up(rows, align), tile_cap)
    n_tiles = _cdiv(rows, tile_s)

    # chunk-parallel axis so small-batch losses still feed both v7x TCs
    n_chunks = min(n_tiles, _cdiv(4, B))
    tiles_per_chunk = _cdiv(n_tiles, n_chunks)
    exact_cover = (n_chunks * tiles_per_chunk == n_tiles) and (n_tiles * tile_s == rows)

    fuse_bce = use_mask and (n_mask * jnp.dtype(mask.dtype).itemsize
                             <= fuse_mask_max_bytes)
    out_rows = 24 if fuse_bce else 16

    def row_blk(i, c, j):
        # clamp fully-out-of-range chunk-tail tiles; the kernel masks them out
        return (i, jnp.minimum(c * tiles_per_chunk + j, n_tiles - 1), 0)

    in_specs = [pl.BlockSpec((None, tile_s, LANE), row_blk),
                pl.BlockSpec((None, tile_s, LANE), row_blk)]
    operands = [jh, jt]

    kern_kwargs = dict(k=k, b=b, use_mweight=use_mweight, use_reg=use_reg, p=p,
                       rows_total=rows, tile_s=tile_s,
                       tiles_per_chunk=tiles_per_chunk, exact_cover=exact_cover)

    flops = 14 * n_jhms
    transcendentals = 0
    bytes_accessed = 2 * n_jhms * in_bytes + B * n_chunks * out_rows * LANE * 4

    if fuse_bce:
        # mask stays in its natural (copy-free) 2D reshape; fetched once
        if n_mask % LANE == 0:
            m2 = mask.reshape(-1, LANE)
            mt2 = mask_target.reshape(-1, LANE)
        else:
            m2 = mask.reshape(-1, mask.shape[-1])
            mt2 = mask_target.reshape(-1, mask_target.shape[-1])
        in_specs += [pl.BlockSpec(m2.shape, lambda i, c, j: (0, 0)),
                     pl.BlockSpec(mt2.shape, lambda i, c, j: (0, 0))]
        operands += [m2, mt2]
        kernel = functools.partial(_jhms_bce_kernel, **kern_kwargs)
        flops += 6 * n_mask
        transcendentals += 2 * n_mask
        bytes_accessed += 2 * n_mask * jnp.dtype(mask.dtype).itemsize
    else:
        kernel = functools.partial(_jhms_kernel, **kern_kwargs)

    part = pl.pallas_call(
        kernel,
        out_shape=jax.ShapeDtypeStruct((B, n_chunks, out_rows, LANE), jnp.float32),
        grid=(B, n_chunks, tiles_per_chunk),
        in_specs=in_specs,
        out_specs=pl.BlockSpec((None, None, out_rows, LANE),
                               lambda i, c, j: (i, c, 0, 0)),
        compiler_params=pltpu.CompilerParams(
            dimension_semantics=("parallel", "parallel", "arbitrary"),
            vmem_limit_bytes=VMEM_LIMIT),
        cost_estimate=pl.CostEstimate(flops=flops,
                                      transcendentals=transcendentals,
                                      bytes_accessed=bytes_accessed),
    )(*operands)

    # ------------------------ tiny JAX glue reductions -----------------------
    sl1_sum = jnp.sum(part[:, :, 0:8, :])
    jhms_loss = sl1_sum / n_jhms
    if use_reg:
        normp = jnp.sum(part[:, :, 8:16, :], axis=(1, 2, 3))     # (B,) sum |x|^p
        reg = normp ** (1.0 / p)                                 # per-batch p-norm
        jhms_loss = jhms_loss + jhms_regular_weight * jnp.mean(reg)

    if use_mask:
        if fuse_bce:
            bce_sum = part[0, 0, 16, 0]
        else:
            bce_sum = _bce_stream(mask, mask_target)
        mask_loss = bce_sum / n_mask
    else:
        mask_loss = jnp.zeros((), jnp.float32)

    total_loss = jhms_loss + mask_weight * mask_loss
    # TODO(synk): PyTorch's lossVal uses .item() host floats; returned here as
    # 0-d JAX scalars instead.
    return total_loss, (total_loss, jhms_loss, mask_loss)


# ----------------------------------------------------------------------------
# Pure-JAX reference mirroring the PyTorch forward (for verification)
# ----------------------------------------------------------------------------
def _reference(jhms, jhms_target, mask, mask_target, *,
               m_weight_jhms_param, mask_weight, jhms_regular_norm,
               jhms_regular_weight):
    k, b = m_weight_jhms_param
    x = jhms.astype(jnp.float32)
    t = jhms_target.astype(jnp.float32)
    d = x - t
    ad = jnp.abs(d)
    sl1 = jnp.where(ad < 1.0, 0.5 * d * d, ad - 0.5)
    if k and b:
        ii = jnp.where(t >= 0.5, 1.0, 0.0)
        sl1 = (k * t + b * ii) * sl1
    jhms_loss = jnp.mean(sl1)
    if jhms_regular_weight:
        flat = x.reshape(x.shape[0], -1)
        reg = jnp.sum(jnp.abs(flat) ** jhms_regular_norm, axis=1) ** (
            1.0 / jhms_regular_norm)
        jhms_loss = jhms_loss + jhms_regular_weight * jnp.mean(reg)
    if mask_weight:
        m = mask.astype(jnp.float32)
        mt = mask_target.astype(jnp.float32)
        bce = -(mt * jnp.maximum(jnp.log(m), -100.0)
                + (1.0 - mt) * jnp.maximum(jnp.log(1.0 - m), -100.0))
        mask_loss = jnp.mean(bce)
    else:
        mask_loss = jnp.zeros((), jnp.float32)
    return jhms_loss + mask_weight * mask_loss


if __name__ == "__main__":
    key = jax.random.PRNGKey(0)
    k1, k2, k3, k4, k5, k6, k7, k8 = jax.random.split(key, 8)

    cfg = dict(m_weight_jhms_param=(2.0, 1.0), mask_weight=0.5,
               jhms_regular_norm=2, jhms_regular_weight=0.01)

    def check(got, want, name):
        got = jax.block_until_ready(got)
        assert jnp.allclose(got, want, rtol=1e-4, atol=1e-5), (
            f"{name} mismatch: pallas={got} ref={want}")

    # --- case 1: standard shapes, fused-BCE fast path -------------------------
    B, C, H, W = 2, 4, 16, 16
    jhms = jax.random.uniform(k1, (B, C, H, W), jnp.float32)
    jhms_t = jax.random.uniform(k2, (B, C, H, W), jnp.float32)
    mask = jax.nn.sigmoid(jax.random.normal(k3, (B, 1, H, W), jnp.float32))
    mask_t = jax.random.uniform(k4, (B, 1, H, W), jnp.float32)

    total, _ = my_loss(jhms, jhms_t, mask, mask_t, **cfg)
    check(total, _reference(jhms, jhms_t, mask, mask_t, **cfg), "case1")

    # --- case 2: ragged feat (1620), forced multi-tile + chunk axis + masking --
    j2 = jax.random.uniform(k5, (1, 5, 18, 18), jnp.float32)
    j2t = jax.random.uniform(k6, (1, 5, 18, 18), jnp.float32)
    m2 = jax.nn.sigmoid(jax.random.normal(k7, (1, 1, 18, 18), jnp.float32))
    m2t = jax.random.uniform(k8, (1, 1, 18, 18), jnp.float32)
    total2, _ = my_loss(j2, j2t, m2, m2t, max_tile_rows=8, **cfg)
    check(total2, _reference(j2, j2t, m2, m2t, **cfg), "case2")

    # --- case 3: mask/reg branches disabled (mirrors `if ...:` gates) ---------
    cfg3 = dict(m_weight_jhms_param=(2.0, 1.0), mask_weight=0.0,
                jhms_regular_norm=2, jhms_regular_weight=0.0)
    total3, _ = my_loss(jhms, jhms_t, mask, mask_t, **cfg3)
    check(total3, _reference(jhms, jhms_t, mask, mask_t, **cfg3), "case3")

    # --- case 4: force the non-fused streaming-BCE fallback path --------------
    total4, _ = my_loss(jhms, jhms_t, mask, mask_t, fuse_mask_max_bytes=0, **cfg)
    check(total4, _reference(jhms, jhms_t, mask, mask_t, **cfg), "case4")

    print("KERNEL_OK")
</pallas_src>

<mosaic_0001>
module attributes {stable_mosaic.version = 11 : i64} {
  func.func @_jhms_bce_kernel(%arg0: i32, %arg1: i32, %arg2: i32, %arg3: memref<1x8x128xf32, #tpu.memory_space<vmem>>, %arg4: memref<1x8x128xf32, #tpu.memory_space<vmem>>, %arg5: memref<4x128xf32, #tpu.memory_space<vmem>>, %arg6: memref<4x128xf32, #tpu.memory_space<vmem>>, %arg7: memref<1x1x24x128xf32, #tpu.memory_space<vmem>>) attributes {dimension_semantics = [#tpu.dimension_semantics<parallel>, #tpu.dimension_semantics<parallel>, #tpu.dimension_semantics<arbitrary>], iteration_bounds = array<i64: 2, 1, 1>, scalar_prefetch = 0 : i64, scratch_operands = 0 : i64, tpu.core_type = #tpu.core_type<tc>, window_params = [{transform_indices = @transform_0, window_bounds = array<i64: 1, 8, 128>}, {transform_indices = @transform_1, window_bounds = array<i64: 1, 8, 128>}, {pipeline_mode = #tpu.pipeline_mode<synchronous>, transform_indices = @transform_2, window_bounds = array<i64: 4, 128>}, {pipeline_mode = #tpu.pipeline_mode<synchronous>, transform_indices = @transform_3, window_bounds = array<i64: 4, 128>}, {transform_indices = @transform_4, window_bounds = array<i64: 1, 1, 24, 128>}]} {
    %c0_i32 = arith.constant 0 : i32
    %0 = arith.cmpi eq, %arg2, %c0_i32 : i32
    %1 = arith.extui %0 : i1 to i32
    %c0_i32_0 = arith.constant 0 : i32
    %2 = arith.cmpi ne, %1, %c0_i32_0 : i32
    scf.if %2 {
      %cst_33 = arith.constant 0.000000e+00 : f32
      %50 = vector.broadcast %cst_33 : f32 to vector<24x128xf32>
      %c0_34 = arith.constant 0 : index
      %c0_35 = arith.constant 0 : index
      %c0_36 = arith.constant 0 : index
      %c0_37 = arith.constant 0 : index
      %51 = vector.load %arg7[%c0_34, %c0_35, %c0_36, %c0_37] : memref<1x1x24x128xf32, #tpu.memory_space<vmem>>, vector<1x1x24x128xf32>
      %52 = vector.shape_cast %51 : vector<1x1x24x128xf32> to vector<24x128xf32>
      %53 = vector.shape_cast %50 : vector<24x128xf32> to vector<1x1x24x128xf32>
      tpu.vector_store %arg7[%c0_34, %c0_35, %c0_36, %c0_37], %53 {strides = array<i32>} : memref<1x1x24x128xf32, #tpu.memory_space<vmem>>, vector<1x1x24x128xf32>,
    } else {
    }
    %c0 = arith.constant 0 : index
    %c0_1 = arith.constant 0 : index
    %c0_2 = arith.constant 0 : index
    %3 = vector.load %arg3[%c0, %c0_1, %c0_2] : memref<1x8x128xf32, #tpu.memory_space<vmem>>, vector<1x8x128xf32>
    %4 = vector.shape_cast %3 : vector<1x8x128xf32> to vector<8x128xf32>
    %c0_3 = arith.constant 0 : index
    %c0_4 = arith.constant 0 : index
    %c0_5 = arith.constant 0 : index
    %5 = vector.load %arg4[%c0_3, %c0_4, %c0_5] : memref<1x8x128xf32, #tpu.memory_space<vmem>>, vector<1x8x128xf32>
    %6 = vector.shape_cast %5 : vector<1x8x128xf32> to vector<8x128xf32>
    %7 = arith.subf %4, %6 : vector<8x128xf32>
    %8 = math.absf %7 : vector<8x128xf32>
    %cst = arith.constant 1.000000e+00 : f32
    %9 = vector.broadcast %cst : f32 to vector<8x128xf32>
    %10 = arith.minimumf %8, %9 : vector<8x128xf32>
    %cst_6 = arith.constant 5.000000e-01 : f32
    %11 = vector.broadcast %cst_6 : f32 to vector<8x128xf32>
    %12 = arith.mulf %11, %10 : vector<8x128xf32>
    %13 = arith.subf %8, %12 : vector<8x128xf32>
    %14 = arith.mulf %10, %13 : vector<8x128xf32>
    %cst_7 = arith.constant 5.000000e-01 : f32
    %15 = vector.broadcast %cst_7 : f32 to vector<8x128xf32>
    %16 = arith.cmpf oge, %6, %15 : vector<8x128xf32>
    %cst_8 = arith.constant 1.000000e+00 : f32
    %cst_9 = arith.constant 0.000000e+00 : f32
    %17 = vector.broadcast %cst_8 : f32 to vector<8x128xf32>
    %18 = vector.broadcast %cst_9 : f32 to vector<8x128xf32>
    %19 = arith.select %16, %17, %18 : vector<8x128xi1>, vector<8x128xf32>
    %cst_10 = arith.constant 2.000000e+00 : f32
    %20 = vector.broadcast %cst_10 : f32 to vector<8x128xf32>
    %21 = arith.mulf %20, %6 : vector<8x128xf32>
    %cst_11 = arith.constant 1.000000e+00 : f32
    %22 = vector.broadcast %cst_11 : f32 to vector<8x128xf32>
    %23 = arith.mulf %22, %19 : vector<8x128xf32>
    %24 = arith.addf %21, %23 : vector<8x128xf32>
    %25 = arith.mulf %24, %14 : vector<8x128xf32>
    %c0_12 = arith.constant 0 : index
    %c0_13 = arith.constant 0 : index
    %c0_14 = arith.constant 0 : index
    %c0_15 = arith.constant 0 : index
    %26 = vector.load %arg7[%c0_12, %c0_13, %c0_14, %c0_15] : memref<1x1x24x128xf32, #tpu.memory_space<vmem>>, vector<1x1x8x128xf32>
    %27 = vector.shape_cast %26 : vector<1x1x8x128xf32> to vector<8x128xf32>
    %28 = vector.shape_cast %25 : vector<8x128xf32> to vector<1x8x128xf32>
    %cst_16 = arith.constant dense<0.000000e+00> : vector<8x128xf32>
    %29 = vector.multi_reduction <add>, %28, %cst_16 [0] : vector<1x8x128xf32> to vector<8x128xf32>
    %30 = arith.addf %27, %29 : vector<8x128xf32>
    %c0_17 = arith.constant 0 : index
    %c0_18 = arith.constant 0 : index
    %c0_19 = arith.constant 0 : index
    %c0_20 = arith.constant 0 : index
    %31 = vector.load %arg7[%c0_17, %c0_18, %c0_19, %c0_20] : memref<1x1x24x128xf32, #tpu.memory_space<vmem>>, vector<1x1x8x128xf32>
    %32 = vector.shape_cast %31 : vector<1x1x8x128xf32> to vector<8x128xf32>
    %33 = vector.shape_cast %30 : vector<8x128xf32> to vector<1x1x8x128xf32>
    tpu.vector_store %arg7[%c0_17, %c0_18, %c0_19, %c0_20], %33 {strides = array<i32>} : memref<1x1x24x128xf32, #tpu.memory_space<vmem>>, vector<1x1x8x128xf32>,
    %34 = arith.mulf %4, %4 : vector<8x128xf32>
    %c0_21 = arith.constant 0 : index
    %c0_22 = arith.constant 0 : index
    %c8 = arith.constant 8 : index
    %c0_23 = arith.constant 0 : index
    %35 = vector.load %arg7[%c0_21, %c0_22, %c8, %c0_23] : memref<1x1x24x128xf32, #tpu.memory_space<vmem>>, vector<1x1x8x128xf32>
    %36 = vector.shape_cast %35 : vector<1x1x8x128xf32> to vector<8x128xf32>
    %37 = vector.shape_cast %34 : vector<8x128xf32> to vector<1x8x128xf32>
    %cst_24 = arith.constant dense<0.000000e+00> : vector<8x128xf32>
    %38 = vector.multi_reduction <add>, %37, %cst_24 [0] : vector<1x8x128xf32> to vector<8x128xf32>
    %39 = arith.addf %36, %38 : vector<8x128xf32>
    %c0_25 = arith.constant 0 : index
    %c0_26 = arith.constant 0 : index
    %c8_27 = arith.constant 8 : index
    %c0_28 = arith.constant 0 : index
    %40 = vector.load %arg7[%c0_25, %c0_26, %c8_27, %c0_28] : memref<1x1x24x128xf32, #tpu.memory_space<vmem>>, vector<1x1x8x128xf32>
    %41 = vector.shape_cast %40 : vector<1x1x8x128xf32> to vector<8x128xf32>
    %42 = vector.shape_cast %39 : vector<8x128xf32> to vector<1x1x8x128xf32>
    tpu.vector_store %arg7[%c0_25, %c0_26, %c8_27, %c0_28], %42 {strides = array<i32>} : memref<1x1x24x128xf32, #tpu.memory_space<vmem>>, vector<1x1x8x128xf32>,
    %c0_i32_29 = arith.constant 0 : i32
    %43 = arith.cmpi eq, %arg2, %c0_i32_29 : i32
    %c0_i32_30 = arith.constant 0 : i32
    %44 = arith.cmpi eq, %arg0, %c0_i32_30 : i32
    %c0_i32_31 = arith.constant 0 : i32
    %45 = arith.cmpi eq, %arg1, %c0_i32_31 : i32
    %46 = arith.andi %44, %45 : i1
    %47 = arith.andi %43, %46 : i1
    %48 = arith.extui %47 : i1 to i32
    %c0_i32_32 = arith.constant 0 : i32
    %49 = arith.cmpi ne, %48, %c0_i32_32 : i32
    scf.if %49 {
      %c0_33 = arith.constant 0 : index
      %c0_34 = arith.constant 0 : index
      %50 = vector.load %arg5[%c0_33, %c0_34] : memref<4x128xf32, #tpu.memory_space<vmem>>, vector<4x128xf32>
      %c0_35 = arith.constant 0 : index
      %c0_36 = arith.constant 0 : index
      %51 = vector.load %arg6[%c0_35, %c0_36] : memref<4x128xf32, #tpu.memory_space<vmem>>, vector<4x128xf32>
      %52 = math.log %50 : vector<4x128xf32>
      %cst_37 = arith.constant -1.000000e+02 : f32
      %53 = vector.broadcast %cst_37 : f32 to vector<4x128xf32>
      %54 = arith.maximumf %52, %53 : vector<4x128xf32>
      %cst_38 = arith.constant 1.000000e+00 : f32
      %55 = vector.broadcast %cst_38 : f32 to vector<4x128xf32>
      %56 = arith.subf %55, %50 : vector<4x128xf32>
      %57 = math.log %56 : vector<4x128xf32>
      %cst_39 = arith.constant -1.000000e+02 : f32
      %58 = vector.broadcast %cst_39 : f32 to vector<4x128xf32>
      %59 = arith.maximumf %57, %58 : vector<4x128xf32>
      %60 = arith.subf %54, %59 : vector<4x128xf32>
      %61 = arith.mulf %51, %60 : vector<4x128xf32>
      %62 = arith.addf %59, %61 : vector<4x128xf32>
      %cst_40 = arith.constant 0.000000e+00 : f32
      %63 = vector.broadcast %cst_40 : f32 to vector<4x128xf32>
      %64 = arith.subf %63, %62 : vector<4x128xf32>
      %65 = vector.shape_cast %64 : vector<4x128xf32> to vector<1x4x128xf32>
      %cst_41 = arith.constant dense<0.000000e+00> : vector<1xf32>
      %66 = vector.multi_reduction <add>, %65, %cst_41 [1, 2] : vector<1x4x128xf32> to vector<1xf32>
      %67 = vector.shape_cast %66 : vector<1xf32> to vector<1x1x1xf32>
      %68 = vector.extract %67[0, 0, 0] : f32 from vector<1x1x1xf32>
      %69 = vector.broadcast %68 : f32 to vector<8x128xf32>
      %c0_42 = arith.constant 0 : index
      %c0_43 = arith.constant 0 : index
      %c16 = arith.constant 16 : index
      %c0_44 = arith.constant 0 : index
      %70 = vector.load %arg7[%c0_42, %c0_43, %c16, %c0_44] : memref<1x1x24x128xf32, #tpu.memory_space<vmem>>, vector<1x1x8x128xf32>
      %71 = vector.shape_cast %70 : vector<1x1x8x128xf32> to vector<8x128xf32>
      %72 = vector.shape_cast %69 : vector<8x128xf32> to vector<1x1x8x128xf32>
      tpu.vector_store %arg7[%c0_42, %c0_43, %c16, %c0_44], %72 {strides = array<i32>} : memref<1x1x24x128xf32, #tpu.memory_space<vmem>>, vector<1x1x8x128xf32>,
    } else {
    }
    return
  }
  func.func @transform_0(%arg0: i32, %arg1: i32, %arg2: i32) -> (i32, i32, i32) {
    %c1_i32 = arith.constant 1 : i32
    %0 = arith.muli %arg1, %c1_i32 : i32
    %1 = arith.addi %0, %arg2 : i32
    %c0_i32 = arith.constant 0 : i32
    %2 = arith.minsi %1, %c0_i32 : i32
    %c0_i32_0 = arith.constant 0 : i32
    %c0_i32_1 = arith.constant 0 : i32
    return %arg0, %2, %c0_i32_0 : i32, i32, i32
  }
  func.func @transform_1(%arg0: i32, %arg1: i32, %arg2: i32) -> (i32, i32, i32) {
    %c1_i32 = arith.constant 1 : i32
    %0 = arith.muli %arg1, %c1_i32 : i32
    %1 = arith.addi %0, %arg2 : i32
    %c0_i32 = arith.constant 0 : i32
    %2 = arith.minsi %1, %c0_i32 : i32
    %c0_i32_0 = arith.constant 0 : i32
    %c0_i32_1 = arith.constant 0 : i32
    return %arg0, %2, %c0_i32_0 : i32, i32, i32
  }
  func.func @transform_2(%arg0: i32, %arg1: i32, %arg2: i32) -> (i32, i32) {
    %c0_i32 = arith.constant 0 : i32
    %c0_i32_0 = arith.constant 0 : i32
    %c0_i32_1 = arith.constant 0 : i32
    return %c0_i32, %c0_i32_0 : i32, i32
  }
  func.func @transform_3(%arg0: i32, %arg1: i32, %arg2: i32) -> (i32, i32) {
    %c0_i32 = arith.constant 0 : i32
    %c0_i32_0 = arith.constant 0 : i32
    %c0_i32_1 = arith.constant 0 : i32
    return %c0_i32, %c0_i32_0 : i32, i32
  }
  func.func @transform_4(%arg0: i32, %arg1: i32, %arg2: i32) -> (i32, i32, i32, i32) {
    %c0_i32 = arith.constant 0 : i32
    %c0_i32_0 = arith.constant 0 : i32
    %c0_i32_1 = arith.constant 0 : i32
    return %arg0, %arg1, %c0_i32, %c0_i32_0 : i32, i32, i32, i32
  }
}

</mosaic_0001>

<llo_original>
// kernel: tpu_custom_call.1
$region0: #{tpu_custom_call.1}
  #allocation0 [shape = 'u32[]', space=smem, size = 0x4, offset = 0x4, fixed_abs, tag = 'smem constant byte address 0x4 - core index']
  #allocation1 [shape = 'u32[144,128]{1,0:T(1,128)}', space=vmem, size = 0x12000, scoped, tag = 'internal scratch']
  %s0 = inlined_call_operand.hbm [shape: f32[2,8,128], index: 0, kind: input, shape index: {}]
  %s1 = inlined_call_operand.hbm [shape: f32[2,8,128], index: 1, kind: input, shape index: {}]
  %s2 = inlined_call_operand.hbm [shape: f32[4,128], index: 2, kind: input, shape index: {}]
  %s3 = inlined_call_operand.vmem [shape: f32[4,128], index: 3, kind: input, shape index: {}]
  %s4 = inlined_call_operand.hbm [shape: f32[2,1,24,128], index: 4, kind: output, shape index: {}]
  %s5 = sld [smem:[#allocation0]]
  $region69: #{tpu_custom_call.1} parent=0
    _
  %s7 = ssub.s32 1, %s5
  %s8 = scalar_select 0, %s7, %s5
  $region1: #{tpu_custom_call.1} parent=0
    #allocation2 [shape = 'u8[8192]{0}', space=vmem, size = 0x2000, scoped, tag = 'input window, operand 0']
    #allocation3 [shape = 's32[2]{0}', space=sflag, size = 0x8, scoped, tag = 'scoped memory for tpu_custom_call.1']
    #allocation4 [shape = 's32[2]{0}', space=sflag, size = 0x8, scoped, tag = 'scoped memory for tpu_custom_call.1']
    #allocation5 [shape = 'u8[8192]{0}', space=vmem, size = 0x2000, scoped, tag = 'input window, operand 1']
    #allocation6 [shape = 's32[2]{0}', space=sflag, size = 0x8, scoped, tag = 'scoped memory for tpu_custom_call.1']
    #allocation7 [shape = 'u8[2048]{0}', space=vmem, size = 0x800, scoped, tag = 'input window, operand 2, single buffered']
    #allocation8 [shape = 'u8[24576]{0}', space=vmem, size = 0x6000, scoped, tag = 'output window, operand 0']
    %9 = vsyncpa [#allocation3], 0
    %s10 = scalar_lea.sflag [#allocation3], 1
    %11 = vsyncpa %s10, 0
    %12 = vsyncpa [#allocation6], 0
    %s13 = scalar_lea.sflag [#allocation6], 1
    %14 = vsyncpa %s13, 0
    %15 = vsyncpa [#allocation4], 0
    %s16 = scalar_lea.sflag [#allocation4], 1
    %17 = vsyncpa %s16, 0
    loop: start=0, step=1, limit=4
    $region2: #{tpu_custom_call.1} parent=1 // loop_pre_header
      _
    $region3: #{tpu_custom_call.1} parent=1 // loop_header
      %s19 = sphi 0, %s23
      %p20 = scmp.ge.s32.totalorder %s19, 4
      %s26 = sphi 0, %s45
      %s27 = sphi 0, %s41
      %s28 = sphi 0, %s37
      %s29 = sphi 0, %s26
      %s30 = sphi 0, %s27
      %s31 = sphi 0, %s28
      %s32 = sphi 0, %s29
      %s33 = sphi 0, %s30
      %s34 = sphi 0, %s31
      %s56 = sphi 0, %s58
      %s59 = sphi 0, %s56
      %s60 = sphi 0, %s59
      %s76 = sphi 0, %s60
      %s90 = sphi 0, %s92
      %s93 = sphi 0, %s90
      %s94 = sphi 0, %s93
      %s110 = sphi 0, %s94
      %s114 = sphi 0, %s114
      %s116 = sphi 0, %s114
      %s117 = sphi 0, %s116
      %s131 = sphi 0, %s117
      %s135 = sphi 0, %s135
      %s137 = sphi 0, %s135
      %s138 = sphi 0, %s137
      %s152 = sphi 0, %s138
      %s160 = sphi 0, %s162
      %s163 = sphi 0, %s160
      %s164 = sphi 0, %s163
      %s180 = sphi 0, %s164
    $region4: #{tpu_custom_call.1} parent=1 // loop_header_branch
      %22 = sbr.rel (%p20) target = $region8
    $region5: #{tpu_custom_call.1} parent=1 // loop_body
      %s24 = ssub.s32 %s19, 1
      %s25 = ssub.s32 %s19, 2
      %s35 = sadd.s32 1, %s28
      %p36 = scmp.ge.s32.totalorder %s35, 1
      %s37 = scalar_select %p36, 0, %s35
      %s38 = sadd.s32 1, %s27
      %s39 = scalar_select %p36, %s38, %s27
      %p40 = scmp.ge.s32.totalorder %s39, 1
      %s41 = scalar_select %p40, 0, %s39
      %s42 = sadd.s32 1, %s26
      %s43 = scalar_select %p40, %s42, %s26
      %p44 = scmp.ge.s32.totalorder %s43, 2
      %s45 = scalar_select %p44, 0, %s43
      %s46 = sadd.s32 %s27, %s28
      %p47 = scmp.lt.s32.totalorder %s46, 0
      %s48 = scalar_select %p47, %s46, 0
      %s49 = sadd.s32 %s41, %s37
      %p50 = scmp.lt.s32.totalorder %s49, 0
      %s51 = scalar_select %p50, %s49, 0
      %s52 = ssub.s32 %s26, %s45
      %s53 = ssub.s32 %s48, %s51
      %s54 = sor.u32 %s52, %s53
      %p55 = scmp.eq.s32.totalorder %s54, 0
      %s57 = sadd.s32 %s56, 1
      %s58 = scalar_select %p55, %s56, %s57
      %p61 = pneg %p55
      %p62 = scmp.eq.s32.totalorder %s19, 1
      %p63 = por %p61, %p62
      %p64 = scmp.ne.s32.totalorder %s56, %s59
      %p65 = scmp.eq.s32.totalorder %s19, 0
      %p66 = por %p64, %p65
      %p67 = scmp.ne.s32.totalorder %s56, %s59
      %p68 = scmp.eq.s32.totalorder %s24, 1
      %p69 = por %p67, %p68
      %p70 = scmp.ne.s32.totalorder %s59, %s60
      %p71 = scmp.eq.s32.totalorder %s24, 0
      %p72 = por %p70, %p71
      %p73 = scmp.ne.s32.totalorder %s59, %s60
      %p74 = scmp.eq.s32.totalorder %s25, 1
      %p75 = por %p73, %p74
      %p77 = scmp.ne.s32.totalorder %s60, %s76
      %p78 = scmp.eq.s32.totalorder %s25, 0
      %p79 = por %p77, %p78
      %s80 = sadd.s32 %s27, %s28
      %p81 = scmp.lt.s32.totalorder %s80, 0
      %s82 = scalar_select %p81, %s80, 0
      %s83 = sadd.s32 %s41, %s37
      %p84 = scmp.lt.s32.totalorder %s83, 0
      %s85 = scalar_select %p84, %s83, 0
      %s86 = ssub.s32 %s26, %s45
      %s87 = ssub.s32 %s82, %s85
      %s88 = sor.u32 %s86, %s87
      %p89 = scmp.eq.s32.totalorder %s88, 0
      %s91 = sadd.s32 %s90, 1
      %s92 = scalar_select %p89, %s90, %s91
      %p95 = pneg %p89
      %p96 = scmp.eq.s32.totalorder %s19, 1
      %p97 = por %p95, %p96
      %p98 = scmp.ne.s32.totalorder %s90, %s93
      %p99 = scmp.eq.s32.totalorder %s19, 0
      %p100 = por %p98, %p99
      %p101 = scmp.ne.s32.totalorder %s90, %s93
      %p102 = scmp.eq.s32.totalorder %s24, 1
      %p103 = por %p101, %p102
      %p104 = scmp.ne.s32.totalorder %s93, %s94
      %p105 = scmp.eq.s32.totalorder %s24, 0
      %p106 = por %p104, %p105
      %p107 = scmp.ne.s32.totalorder %s93, %s94
      %p108 = scmp.eq.s32.totalorder %s25, 1
      %p109 = por %p107, %p108
      %p111 = scmp.ne.s32.totalorder %s94, %s110
      %p112 = scmp.eq.s32.totalorder %s25, 0
      %p113 = por %p111, %p112
      %s115 = sadd.s32 %s114, 1
      %p118 = scmp.eq.s32.totalorder %s19, 1
      %p119 = scmp.ne.s32.totalorder %s114, %s116
      %p120 = scmp.eq.s32.totalorder %s19, 0
      %p121 = por %p119, %p120
      %p122 = scmp.ne.s32.totalorder %s114, %s116
      %p123 = scmp.eq.s32.totalorder %s24, 1
      %p124 = por %p122, %p123
      %p125 = scmp.ne.s32.totalorder %s116, %s117
      %p126 = scmp.eq.s32.totalorder %s24, 0
      %p127 = por %p125, %p126
      %p128 = scmp.ne.s32.totalorder %s116, %s117
      %p129 = scmp.eq.s32.totalorder %s25, 1
      %p130 = por %p128, %p129
      %p132 = scmp.ne.s32.totalorder %s117, %s131
      %p133 = scmp.eq.s32.totalorder %s25, 0
      %p134 = por %p132, %p133
      %s136 = sadd.s32 %s135, 1
      %p139 = scmp.eq.s32.totalorder %s19, 1
      %p140 = scmp.ne.s32.totalorder %s135, %s137
      %p141 = scmp.eq.s32.totalorder %s19, 0
      %p142 = por %p140, %p141
      %p143 = scmp.ne.s32.totalorder %s135, %s137
      %p144 = scmp.eq.s32.totalorder %s24, 1
      %p145 = por %p143, %p144
      %p146 = scmp.ne.s32.totalorder %s137, %s138
      %p147 = scmp.eq.s32.totalorder %s24, 0
      %p148 = por %p146, %p147
      %p149 = scmp.ne.s32.totalorder %s137, %s138
      %p150 = scmp.eq.s32.totalorder %s25, 1
      %p151 = por %p149, %p150
      %p153 = scmp.ne.s32.totalorder %s138, %s152
      %p154 = scmp.eq.s32.totalorder %s25, 0
      %p155 = por %p153, %p154
      %s156 = ssub.s32 %s26, %s45
      %s157 = ssub.s32 %s27, %s41
      %s158 = sor.u32 %s156, %s157
      %p159 = scmp.eq.s32.totalorder %s158, 0
      %s161 = sadd.s32 %s160, 1
      %s162 = scalar_select %p159, %s160, %s161
      %p165 = pneg %p159
      %p166 = scmp.eq.s32.totalorder %s19, 1
      %p167 = por %p165, %p166
      %p168 = scmp.ne.s32.totalorder %s160, %s163
      %p169 = scmp.eq.s32.totalorder %s19, 0
      %p170 = por %p168, %p169
      %p171 = scmp.ne.s32.totalorder %s160, %s163
      %p172 = scmp.eq.s32.totalorder %s24, 1
      %p173 = por %p171, %p172
      %p174 = scmp.ne.s32.totalorder %s163, %s164
      %p175 = scmp.eq.s32.totalorder %s24, 0
      %p176 = por %p174, %p175
      %p177 = scmp.ne.s32.totalorder %s163, %s164
      %p178 = scmp.eq.s32.totalorder %s25, 1
      %p179 = por %p177, %p178
      %p181 = scmp.ne.s32.totalorder %s164, %s180
      %p182 = scmp.eq.s32.totalorder %s25, 0
      %p183 = por %p181, %p182
      %p184 = scmp.le.s32.totalorder 1, %s19
      %p185 = scmp.lt.s32.totalorder %s19, 3
      %p186 = pnand %p184, %p185
      %p187 = pneg %p186
      // Predicated region
      $region9: #{tpu_custom_call.1} parent=5 // pred_check
        _
      $region10: #{tpu_custom_call.1} parent=5 // pred_check_branch
        %189 = sbr.rel (%p186) target = $region12
      $region11: #{tpu_custom_call.1} parent=5 // pred_region
        %s190 = ssub.s32 %s19, 1
        // Predicated region
        $region13: #{tpu_custom_call.1} parent=11 // pred_check
          %p191 = pneg %p127
        $region14: #{tpu_custom_call.1} parent=11 // pred_check_branch
          %193 = sbr.rel (%p191) target = $region16
        $region15: #{tpu_custom_call.1} parent=11 // pred_region
          %s195 = ssub.s32 64, 64
          %196 = vsyncadd [#allocation6], %s195
          %s198 = sshll.u32 [#allocation7], 4
          %s199 = int_to_ptr.vmem [resolvable:$true] %s198
          %201 = dma.hbm_to_vmem [thread:$0]  %s2, 64, %s199, [#allocation6]
        $region16: #{tpu_custom_call.1} parent=11 // pred_fallthru
          _
        // Predicated region
        $region17: #{tpu_custom_call.1} parent=11 // pred_check
          %p202 = pneg %p148
        $region18: #{tpu_custom_call.1} parent=11 // pred_check_branch
          %204 = sbr.rel (%p202) target = $region20
        $region19: #{tpu_custom_call.1} parent=11 // pred_region
          _
        $region20: #{tpu_custom_call.1} parent=11 // pred_fallthru
          _
      $region12: #{tpu_custom_call.1} parent=5 // pred_fallthru
        _
      %p205 = scmp.lt.s32.totalorder %s19, 2
      // Predicated region
      $region21: #{tpu_custom_call.1} parent=5 // pred_check
        %p206 = pneg %p205
      $region22: #{tpu_custom_call.1} parent=5 // pred_check_branch
        %208 = sbr.rel (%p206) target = $region24
      $region23: #{tpu_custom_call.1} parent=5 // pred_region
        // Predicated region
        $region25: #{tpu_custom_call.1} parent=23 // pred_check
          %p209 = pneg %p66
        $region26: #{tpu_custom_call.1} parent=23 // pred_check_branch
          %211 = sbr.rel (%p209) target = $region28
        $region27: #{tpu_custom_call.1} parent=23 // pred_region
          %s212 = sand.u32 %s56, 1
          %s213 = scalar_lea.sflag [#allocation3], %s212
          %s214 = sand.u32 %s56, 1
          %s215 = smul.addr %s214, 8
          %s216 = scalar_lea.vmem [#allocation2], %s215
          %s217 = sadd.s32 %s27, %s28
          %p218 = scmp.lt.s32.totalorder %s217, 0
          %s219 = scalar_select %p218, %s217, 0
          %s221 = ssub.s32 128, 128
          %222 = vsyncadd %s213, %s221
          %s223 = sadd.s32 %s219, %s26
          %s224 = smul.addr %s223, 128
          %s225 = scalar_lea.hbm %s0, %s224
          %s227 = sshll.u32 %s216, 4
          %s228 = int_to_ptr.vmem [resolvable:$true] %s227
          %230 = dma.hbm_to_vmem [thread:$0]  %s225, 128, %s228, %s213
        $region28: #{tpu_custom_call.1} parent=23 // pred_fallthru
          _
        // Predicated region
        $region29: #{tpu_custom_call.1} parent=23 // pred_check
          %p231 = pneg %p100
        $region30: #{tpu_custom_call.1} parent=23 // pred_check_branch
          %233 = sbr.rel (%p231) target = $region32
        $region31: #{tpu_custom_call.1} parent=23 // pred_region
          %s234 = sand.u32 %s19, 1
          %s235 = scalar_lea.sflag [#allocation6], %s234
          %s236 = sand.u32 %s90, 1
          %s237 = smul.addr %s236, 8
          %s238 = scalar_lea.vmem [#allocation5], %s237
          %s239 = sadd.s32 %s27, %s28
          %p240 = scmp.lt.s32.totalorder %s239, 0
          %s241 = scalar_select %p240, %s239, 0
          %s243 = ssub.s32 128, 128
          %244 = vsyncadd %s235, %s243
          %s245 = sadd.s32 %s241, %s26
          %s246 = smul.addr %s245, 128
          %s247 = scalar_lea.hbm %s1, %s246
          %s249 = sshll.u32 %s238, 4
          %s250 = int_to_ptr.vmem [resolvable:$true] %s249
          %252 = dma.hbm_to_vmem [thread:$0]  %s247, 128, %s250, %s235
        $region32: #{tpu_custom_call.1} parent=23 // pred_fallthru
          _
      $region24: #{tpu_custom_call.1} parent=5 // pred_fallthru
        _
      %p253 = scmp.le.s32.totalorder 1, %s19
      %p254 = scmp.lt.s32.totalorder %s19, 3
      %p255 = pnand %p253, %p254
      %p256 = pneg %p255
      // Predicated region
      $region33: #{tpu_custom_call.1} parent=5 // pred_check
        _
      $region34: #{tpu_custom_call.1} parent=5 // pred_check_branch
        %258 = sbr.rel (%p255) target = $region36
      $region35: #{tpu_custom_call.1} parent=5 // pred_region
        %s259 = ssub.s32 %s19, 1
        %s260 = sand.u32 %s59, 1
        %s261 = scalar_lea.sflag [#allocation3], %s260
        %s262 = sand.u32 %s59, 1
        %s263 = smul.addr %s262, 8
        %s264 = scalar_lea.vmem [#allocation2], %s263
        // Predicated region
        $region37: #{tpu_custom_call.1} parent=35 // pred_check
          %p265 = pneg %p72
        $region38: #{tpu_custom_call.1} parent=35 // pred_check_branch
          %267 = sbr.rel (%p265) target = $region40
        $region39: #{tpu_custom_call.1} parent=35 // pred_region
          %268 = dma.done %s261, 128
        $region40: #{tpu_custom_call.1} parent=35 // pred_fallthru
          _
        %s269 = sand.u32 %s24, 1
        %s270 = scalar_lea.sflag [#allocation6], %s269
        %s271 = sand.u32 %s93, 1
        %s272 = smul.addr %s271, 8
        %s273 = scalar_lea.vmem [#allocation5], %s272
        // Predicated region
        $region41: #{tpu_custom_call.1} parent=35 // pred_check
          %p274 = pneg %p106
        $region42: #{tpu_custom_call.1} parent=35 // pred_check_branch
          %276 = sbr.rel (%p274) target = $region44
        $region43: #{tpu_custom_call.1} parent=35 // pred_region
          %277 = dma.done %s270, 128
        $region44: #{tpu_custom_call.1} parent=35 // pred_fallthru
          _
        // Predicated region
        $region45: #{tpu_custom_call.1} parent=35 // pred_check
          %p278 = pneg %p127
        $region46: #{tpu_custom_call.1} parent=35 // pred_check_branch
          %280 = sbr.rel (%p278) target = $region48
        $region47: #{tpu_custom_call.1} parent=35 // pred_region
          %281 = dma.done [#allocation6], 64
        $region48: #{tpu_custom_call.1} parent=35 // pred_fallthru
          _
        %s282 = sand.u32 %s59, 1
        %s283 = scalar_lea.sflag [#allocation3], %s282
        %s284 = sand.u32 %s59, 1
        %s285 = smul.addr %s284, 8
        %s286 = scalar_lea.vmem [#allocation2], %s285
        %p287 = pneg %p72
        %p288 = pneg %p69
        %s289 = sand.u32 %s24, 1
        %s290 = scalar_lea.sflag [#allocation6], %s289
        %s291 = sand.u32 %s93, 1
        %s292 = smul.addr %s291, 8
        %s293 = scalar_lea.vmem [#allocation5], %s292
        %p294 = pneg %p106
        %p295 = pneg %p103
        %p296 = pneg %p127
        %p297 = pneg %p124
        %p298 = pneg %p148
        %p299 = pneg %p145
        %p300 = pneg %p176
        %p301 = pneg %p173
        %s302 = sand.u32 %s163, 1
        %s303 = scalar_lea.sflag [#allocation4], %s302
        %s304 = sand.u32 %s163, 1
        %s305 = smul.addr %s304, 24
        %s306 = scalar_lea.vmem [#allocation8], %s305
        %s307 = sadd.s32 %s30, %s31
        %p308 = scmp.lt.s32.totalorder %s307, 0
        %s309 = scalar_select %p308, %s307, 0
        %s310 = sadd.s32 %s30, %s31
        %p311 = scmp.lt.s32.totalorder %s310, 0
        %s312 = scalar_select %p311, %s310, 0
        %p313 = scmp.eq.s32.totalorder %s31, 0
        // Predicated region
        $region49: #{tpu_custom_call.1} parent=35 // pred_check
          %p314 = pneg %p313
        $region50: #{tpu_custom_call.1} parent=35 // pred_check_branch
          %316 = sbr.rel (%p314) target = $region52
        $region51: #{tpu_custom_call.1} parent=35 // pred_region
          %317 = vst [vmem:[%s306] sm:$0xff] 0.0
          %318 = vst [vmem:[%s306 + $0x8] sm:$0xff] 0.0
          %319 = vst [vmem:[%s306 + $0x10] sm:$0xff] 0.0
        $region52: #{tpu_custom_call.1} parent=35 // pred_fallthru
          _
        %v320 = vld [vmem:[%s264] sm:$0xff]
        %v321 = vld [vmem:[%s273] sm:$0xff]
        %v322 = vsub.f32 %v320, %v321
        %v323 = vand.u32 2147483647, %v322
        %v324 = vmin.f32 %v323, 1.0
        %v325 = vmul.f32 %v324, 0.5
        %v326 = vsub.f32 %v323, %v325
        %v327 = vmul.f32 %v324, %v326
        %vm328 = vcmp.ge.f32.partialorder %v321, 0.5
        %v329 = vsel %vm328, 1.0, 0.0
        %v330 = vmul.f32 %v321, 2.0
        %v331 = vadd.f32 %v330, %v329
        %v332 = vmul.f32 %v331, %v327
        %v333 = vld [vmem:[%s306] sm:$0xff]
        %v334 = vadd.f32 %v332, 0.0
        %v335 = vadd.f32 %v333, %v334
        %336 = vst [vmem:[%s306] sm:$0xff] %v335
        %v337 = vmul.f32 %v320, %v320
        %v338 = vld [vmem:[%s306 + $0x8] sm:$0xff]
        %v339 = vadd.f32 %v337, 0.0
        %v340 = vadd.f32 %v338, %v339
        %341 = vst [vmem:[%s306 + $0x8] sm:$0xff] %v340
        %p342 = scmp.eq.s32.totalorder %s29, 0
        %p343 = scmp.eq.s32.totalorder %s30, 0
        %p344 = pnand %p342, %p343
        %p345 = pneg %p344
        %p346 = pnand %p313, %p345
        %p347 = pneg %p346
        // Predicated region
        $region53: #{tpu_custom_call.1} parent=35 // pred_check
          _
        $region54: #{tpu_custom_call.1} parent=35 // pred_check_branch
          %349 = sbr.rel (%p346) target = $region56
        $region55: #{tpu_custom_call.1} parent=35 // pred_region
          %v350 = vld [vmem:[#allocation7] sm:$0xf]
          %v351 = vld [vmem:[%s3] sm:$0xf]
          %v352 = vlog2.pop %v350
          %v353 = vmul.f32 %v352, 0.6931472
          %v354 = vmax.f32 %v353, -100.0
          %v355 = vsub.f32 1.0, %v350
          %v356 = vlog2.pop %v355
          %v357 = vmul.f32 %v356, 0.6931472
          %v358 = vmax.f32 %v357, -100.0
          %v359 = vsub.f32 %v354, %v358
          %v360 = vmul.f32 %v351, %v359
          %v361 = vadd.f32 %v358, %v360
          %v362 = vsub.f32 0.0, %v361
          %vm363 = vcmask 1043456
          %v364 = vsel %vm363, %v362, 0.0
          %365 = vadd.xlane.f32.xlu0 %v364
          %v366 = vpop.xlane.xlu0 %365
          %v367 = vrot.slane %v366, 4
          %v368 = vadd.f32 %v366, %v367
          %v369 = vrot.slane %v368, 2
          %v370 = vadd.f32 %v368, %v369
          %v371 = vrot.slane %v370, 1
          %v372 = vadd.f32 %v370, %v371
          %s373 = vtos %v372
          %v374 = vstv %s373
          %375 = vst [vmem:[%s306 + $0x10] sm:$0xff] %v374
        $region56: #{tpu_custom_call.1} parent=35 // pred_fallthru
          _
        %s376 = sand.u32 %s163, 1
        %s377 = scalar_lea.sflag [#allocation4], %s376
        %s378 = sand.u32 %s163, 1
        %s379 = smul.addr %s378, 24
        %s380 = scalar_lea.vmem [#allocation8], %s379
        // Predicated region
        $region57: #{tpu_custom_call.1} parent=35 // pred_check
          %p381 = pneg %p173
        $region58: #{tpu_custom_call.1} parent=35 // pred_check_branch
          %383 = sbr.rel (%p381) target = $region60
        $region59: #{tpu_custom_call.1} parent=35 // pred_region
          %s385 = ssub.s32 384, 384
          %386 = vsyncadd %s377, %s385
          %s387 = smul.addr %s30, 3
          %s388 = smul.addr %s29, 3
          %s389 = sadd.s32 %s387, %s388
          %s390 = smul.addr %s389, 128
          %s391 = scalar_lea.hbm %s4, %s390
          %s392 = sshll.u32 %s380, 4
          %s393 = int_to_ptr.vmem [resolvable:$true] %s392
          %398 = dma.vmem_to_hbm [thread:$0]  %s393, 384, %s391, %s377, 128, 128, 8
        $region60: #{tpu_custom_call.1} parent=35 // pred_fallthru
          _
      $region36: #{tpu_custom_call.1} parent=5 // pred_fallthru
        _
      %p399 = scmp.le.s32.totalorder 2, %s19
      // Predicated region
      $region61: #{tpu_custom_call.1} parent=5 // pred_check
        %p400 = pneg %p399
      $region62: #{tpu_custom_call.1} parent=5 // pred_check_branch
        %402 = sbr.rel (%p400) target = $region64
      $region63: #{tpu_custom_call.1} parent=5 // pred_region
        %s403 = ssub.s32 %s19, 2
        // Predicated region
        $region65: #{tpu_custom_call.1} parent=63 // pred_check
          %p404 = pneg %p179
        $region66: #{tpu_custom_call.1} parent=63 // pred_check_branch
          %406 = sbr.rel (%p404) target = $region68
        $region67: #{tpu_custom_call.1} parent=63 // pred_region
          %s407 = sand.u32 %s164, 1
          %s408 = scalar_lea.sflag [#allocation4], %s407
          %s409 = sand.u32 %s164, 1
          %s410 = smul.addr %s409, 24
          %s411 = scalar_lea.vmem [#allocation8], %s410
          %412 = dma.done %s408, 384
        $region68: #{tpu_custom_call.1} parent=63 // pred_fallthru
          _
      $region64: #{tpu_custom_call.1} parent=5 // pred_fallthru
        _
    $region6: #{tpu_custom_call.1} parent=1 // loop_footer
      %s23 = sadd.s32 1, %s19
    $region7: #{tpu_custom_call.1} parent=1 // loop_footer_branch
      %18 = sbr.rel target = $region3
    $region8: #{tpu_custom_call.1} parent=1 // loop_exit
      _
    %413 = vsyncpa [#allocation3], 1
    %s414 = scalar_lea.sflag [#allocation3], 1
    %415 = vsyncpa %s414, 1
    %416 = vsyncpa [#allocation6], 1
    %s417 = scalar_lea.sflag [#allocation6], 1
    %418 = vsyncpa %s417, 1
    %419 = vsyncpa [#allocation4], 1
    %s420 = scalar_lea.sflag [#allocation4], 1
    %421 = vsyncpa %s420, 1

</llo_original>
